<compile_context>
chip_gen: v7x
topology: tpu7x:2x2x1
jax: 0.10.0
libtpu: 0.0.40
codegen_flags: <defaults>
</compile_context>

<pallas_src>
import functools

import jax
import jax.numpy as jnp
from jax.experimental import pallas as pl
from jax.experimental.pallas import tpu as pltpu


def _round_up(x, m):
    return pl.cdiv(x, m) * m


def predictor_kernel(x_ref, w1_ref, b1_ref, w2_ref, b2_ref, o_ref):
    # x : (TB, in_dim)  f32   (cast to bf16 in-kernel)
    # w1: (in_dim, HID_P) bf16 ; b1: (1, HID_P) f32
    # w2: (HID_P, out_dim) bf16 ; b2: (1, out_dim) f32
    # o : (TB, out_dim) f32 (or bf16)
    x = x_ref[...].astype(w1_ref.dtype)                                # VPU cast, hidden under DMA
    h = jnp.dot(x, w1_ref[...], preferred_element_type=jnp.float32)    # MXU, f32 acc
    h = jnp.maximum(h + b1_ref[...], 0.0)                              # VPU, f32 bias+ReLU
    h = h.astype(w2_ref.dtype)                                         # bf16 for second MXU pass
    y = jnp.dot(h, w2_ref[...], preferred_element_type=jnp.float32)    # MXU, f32 acc
    o_ref[...] = (y + b2_ref[...]).astype(o_ref.dtype)                 # unpadded store


def prepare_params(w1, b1, w2, b2, compute_dtype=jnp.bfloat16):
    """One-time prep: cast weights to compute dtype; zero-pad ONLY the hidden
    dim up to a multiple of 128 (lane-dense h / w2 rows).  Padded hidden columns
    have zero weight & bias (ReLU(0)=0) and padded w2 rows are zero, so the math
    is unchanged.  The output feature dim is left unpadded."""
    in_dim, hidden_dim = w1.shape
    out_dim = w2.shape[1]
    hid_p = max(int(_round_up(hidden_dim, 128)), 128)

    w1p = jnp.zeros((in_dim, hid_p), compute_dtype).at[:, :hidden_dim].set(
        w1.astype(compute_dtype))
    b1p = jnp.zeros((1, hid_p), jnp.float32).at[:, :hidden_dim].set(
        b1.astype(jnp.float32))
    w2p = jnp.zeros((hid_p, out_dim), compute_dtype).at[:hidden_dim, :].set(
        w2.astype(compute_dtype))
    b2p = b2.astype(jnp.float32).reshape(1, out_dim)
    return (w1p, b1p, w2p, b2p)


def _choose_tb(batch, tb_req):
    """Batch-tile rows: multiple of 16 (bf16 sublane packing of the in-kernel
    cast), not larger than the (rounded) batch, and capped so there are >= 2
    grid steps for large batches (v7x megacore)."""
    if batch <= 16:
        return int(_round_up(batch, 8))
    tb = max(16, (int(tb_req) // 16) * 16)
    half = int(_round_up(pl.cdiv(batch, 2), 16))   # ensures >= 2 grid steps
    return min(tb, half)


@functools.partial(jax.jit, static_argnames=("tb", "out_dtype"))
def predictor_forward(x, params, tb=4096, out_dtype=jnp.float32):
    """x: (B, in_dim) f32. Returns (B, out_dim) in out_dtype (default f32)."""
    w1p, b1p, w2p, b2p = params
    B, in_dim = x.shape
    hid_p = w1p.shape[1]
    out_dim = w2p.shape[1]

    tb = _choose_tb(B, tb)
    grid = (int(pl.cdiv(B, tb)),)

    out_itemsize = jnp.dtype(out_dtype).itemsize
    weights_bytes = (w1p.size * w1p.dtype.itemsize + w2p.size * w2p.dtype.itemsize
                     + b1p.size * 4 + b2p.size * 4)

    # Rough per-step VMEM footprint (double-buffered I/O tiles + intermediates
    # + resident weights); raise the scoped limit for big tiles (v5e default is
    # 16 MiB), never above 64 MiB (v7x physical per-TC VMEM).
    tile_bytes = (2 * tb * in_dim * 4            # x tile, f32, double-buffered
                  + 2 * tb * out_dim * out_itemsize  # out tile, double-buffered
                  + tb * in_dim * 2              # bf16 cast of x
                  + tb * hid_p * (4 + 2)         # h in f32 and bf16
                  + tb * out_dim * 4             # y f32
                  + 2 * weights_bytes)
    vmem_limit = int(min(max(2 * tile_bytes, 32 << 20), 64 << 20))

    flops = 2 * B * (in_dim * hid_p + hid_p * out_dim)
    bytes_accessed = (B * in_dim * 4 + weights_bytes + B * out_dim * out_itemsize)

    out = pl.pallas_call(
        predictor_kernel,
        out_shape=jax.ShapeDtypeStruct((B, out_dim), out_dtype),
        grid=grid,
        in_specs=[
            pl.BlockSpec((tb, in_dim), lambda i: (i, 0)),      # x: tiled over batch (edge-safe)
            pl.BlockSpec((in_dim, hid_p), lambda i: (0, 0)),   # w1: VMEM-resident
            pl.BlockSpec((1, hid_p), lambda i: (0, 0)),        # b1: VMEM-resident
            pl.BlockSpec((hid_p, out_dim), lambda i: (0, 0)),  # w2: VMEM-resident
            pl.BlockSpec((1, out_dim), lambda i: (0, 0)),      # b2: VMEM-resident
        ],
        out_specs=pl.BlockSpec((tb, out_dim), lambda i: (i, 0)),  # unpadded output
        compiler_params=pltpu.CompilerParams(
            dimension_semantics=("parallel",),                 # megacore on v7x
            vmem_limit_bytes=vmem_limit,
        ),
        cost_estimate=pl.CostEstimate(
            flops=flops, transcendentals=0, bytes_accessed=bytes_accessed),
    )(x, w1p, b1p, w2p, b2p)

    return out


def init_params(key, in_dim=64, hidden_dim=32, out_dim=64, dtype=jnp.float32):
    """Mimics PyTorch nn.Linear init (uniform(-1/sqrt(fan_in), 1/sqrt(fan_in))).
    Weights stored transposed relative to PyTorch: (fan_in, fan_out)."""
    k1, k2, k3, k4 = jax.random.split(key, 4)
    bound1 = 1.0 / (in_dim ** 0.5)
    bound2 = 1.0 / (hidden_dim ** 0.5)
    w1 = jax.random.uniform(k1, (in_dim, hidden_dim), dtype, -bound1, bound1)
    b1 = jax.random.uniform(k2, (hidden_dim,), dtype, -bound1, bound1)
    w2 = jax.random.uniform(k3, (hidden_dim, out_dim), dtype, -bound2, bound2)
    b2 = jax.random.uniform(k4, (out_dim,), dtype, -bound2, bound2)
    return w1, b1, w2, b2


if __name__ == "__main__":
    in_dim, hidden_dim, out_dim = 64, 32, 64

    key = jax.random.PRNGKey(0)
    kx, kx2, kp = jax.random.split(key, 3)
    w1, b1, w2, b2 = init_params(kp, in_dim, hidden_dim, out_dim)
    params = prepare_params(w1, b1, w2, b2)

    # Case 1: small batch (single tile).
    x = jax.random.normal(kx, (8, in_dim), jnp.float32)
    out = jax.block_until_ready(predictor_forward(x, params))
    ref = jnp.maximum(x @ w1 + b1, 0.0) @ w2 + b2
    assert out.shape == (8, out_dim)
    assert jnp.allclose(out, ref, atol=2e-2, rtol=2e-2), \
        f"max abs err = {jnp.max(jnp.abs(out - ref))}"

    # Case 2: ragged batch with a multi-step grid (exercises edge-block
    # handling: no jnp.pad, no output slice).
    x2 = jax.random.normal(kx2, (50, in_dim), jnp.float32)
    out2 = jax.block_until_ready(predictor_forward(x2, params, tb=16))
    ref2 = jnp.maximum(x2 @ w1 + b1, 0.0) @ w2 + b2
    assert out2.shape == (50, out_dim)
    assert jnp.allclose(out2, ref2, atol=2e-2, rtol=2e-2), \
        f"max abs err = {jnp.max(jnp.abs(out2 - ref2))}"

    print("KERNEL_OK")
</pallas_src>

<mosaic_0001>
module attributes {stable_mosaic.version = 11 : i64} {
  func.func @predictor_kernel(%arg0: i32, %arg1: memref<8x64xf32, #tpu.memory_space<vmem>>, %arg2: memref<64x128xbf16, #tpu.memory_space<vmem>>, %arg3: memref<1x128xf32, #tpu.memory_space<vmem>>, %arg4: memref<128x64xbf16, #tpu.memory_space<vmem>>, %arg5: memref<1x64xf32, #tpu.memory_space<vmem>>, %arg6: memref<8x64xf32, #tpu.memory_space<vmem>>) attributes {dimension_semantics = [#tpu.dimension_semantics<parallel>], iteration_bounds = array<i64: 1>, scalar_prefetch = 0 : i64, scratch_operands = 0 : i64, tpu.core_type = #tpu.core_type<tc>, window_params = [{transform_indices = @transform_0, window_bounds = array<i64: 8, 64>}, {pipeline_mode = #tpu.pipeline_mode<synchronous>, transform_indices = @transform_1, window_bounds = array<i64: 64, 128>}, {pipeline_mode = #tpu.pipeline_mode<synchronous>, transform_indices = @transform_2, window_bounds = array<i64: 1, 128>}, {pipeline_mode = #tpu.pipeline_mode<synchronous>, transform_indices = @transform_3, window_bounds = array<i64: 128, 64>}, {pipeline_mode = #tpu.pipeline_mode<synchronous>, transform_indices = @transform_4, window_bounds = array<i64: 1, 64>}, {transform_indices = @transform_5, window_bounds = array<i64: 8, 64>}]} {
    %c0 = arith.constant 0 : index
    %c0_0 = arith.constant 0 : index
    %0 = vector.load %arg1[%c0, %c0_0] : memref<8x64xf32, #tpu.memory_space<vmem>>, vector<8x64xf32>
    %1 = arith.truncf %0 : vector<8x64xf32> to vector<8x64xbf16>
    %c0_1 = arith.constant 0 : index
    %c0_2 = arith.constant 0 : index
    %2 = vector.load %arg2[%c0_1, %c0_2] : memref<64x128xbf16, #tpu.memory_space<vmem>>, vector<64x128xbf16>
    %cst = arith.constant dense<0.000000e+00> : vector<8x128xf32>
    %3 = tpu.matmul %1, %2, %cst {dimension_numbers = #tpu.dot_dimension_numbers<[1], [0], [0], [1], [0, 0, 1, 1], [], []>} : vector<8x64xbf16>, vector<64x128xbf16>, vector<8x128xf32> -> vector<8x128xf32>
    %c0_3 = arith.constant 0 : index
    %c0_4 = arith.constant 0 : index
    %4 = vector.load %arg3[%c0_3, %c0_4] : memref<1x128xf32, #tpu.memory_space<vmem>>, vector<1x128xf32>
    %5 = vector.broadcast %4 : vector<1x128xf32> to vector<8x128xf32>
    %6 = arith.addf %3, %5 : vector<8x128xf32>
    %cst_5 = arith.constant 0.000000e+00 : f32
    %7 = vector.broadcast %cst_5 : f32 to vector<8x128xf32>
    %8 = arith.maximumf %6, %7 : vector<8x128xf32>
    %9 = arith.truncf %8 : vector<8x128xf32> to vector<8x128xbf16>
    %c0_6 = arith.constant 0 : index
    %c0_7 = arith.constant 0 : index
    %10 = vector.load %arg4[%c0_6, %c0_7] : memref<128x64xbf16, #tpu.memory_space<vmem>>, vector<128x64xbf16>
    %cst_8 = arith.constant dense<0.000000e+00> : vector<8x64xf32>
    %11 = tpu.matmul %9, %10, %cst_8 {dimension_numbers = #tpu.dot_dimension_numbers<[1], [0], [0], [1], [0, 0, 1, 1], [], []>} : vector<8x128xbf16>, vector<128x64xbf16>, vector<8x64xf32> -> vector<8x64xf32>
    %c0_9 = arith.constant 0 : index
    %c0_10 = arith.constant 0 : index
    %12 = vector.load %arg5[%c0_9, %c0_10] : memref<1x64xf32, #tpu.memory_space<vmem>>, vector<1x64xf32>
    %13 = vector.broadcast %12 : vector<1x64xf32> to vector<8x64xf32>
    %14 = arith.addf %11, %13 : vector<8x64xf32>
    %c0_11 = arith.constant 0 : index
    %c0_12 = arith.constant 0 : index
    %15 = vector.load %arg6[%c0_11, %c0_12] : memref<8x64xf32, #tpu.memory_space<vmem>>, vector<8x64xf32>
    tpu.vector_store %arg6[%c0_11, %c0_12], %14 {strides = array<i32>} : memref<8x64xf32, #tpu.memory_space<vmem>>, vector<8x64xf32>,
    return
  }
  func.func @transform_0(%arg0: i32) -> (i32, i32) {
    %c0_i32 = arith.constant 0 : i32
    %c0_i32_0 = arith.constant 0 : i32
    return %arg0, %c0_i32 : i32, i32
  }
  func.func @transform_1(%arg0: i32) -> (i32, i32) {
    %c0_i32 = arith.constant 0 : i32
    %c0_i32_0 = arith.constant 0 : i32
    %c0_i32_1 = arith.constant 0 : i32
    return %c0_i32, %c0_i32_0 : i32, i32
  }
  func.func @transform_2(%arg0: i32) -> (i32, i32) {
    %c0_i32 = arith.constant 0 : i32
    %c0_i32_0 = arith.constant 0 : i32
    %c0_i32_1 = arith.constant 0 : i32
    return %c0_i32, %c0_i32_0 : i32, i32
  }
  func.func @transform_3(%arg0: i32) -> (i32, i32) {
    %c0_i32 = arith.constant 0 : i32
    %c0_i32_0 = arith.constant 0 : i32
    %c0_i32_1 = arith.constant 0 : i32
    return %c0_i32, %c0_i32_0 : i32, i32
  }
  func.func @transform_4(%arg0: i32) -> (i32, i32) {
    %c0_i32 = arith.constant 0 : i32
    %c0_i32_0 = arith.constant 0 : i32
    %c0_i32_1 = arith.constant 0 : i32
    return %c0_i32, %c0_i32_0 : i32, i32
  }
  func.func @transform_5(%arg0: i32) -> (i32, i32) {
    %c0_i32 = arith.constant 0 : i32
    %c0_i32_0 = arith.constant 0 : i32
    return %arg0, %c0_i32 : i32, i32
  }
}

</mosaic_0001>

<llo_original>
// kernel: predictor_forward.1
$region0: #{predictor_forward.1}
  #allocation0 [shape = 'u32[]', space=smem, size = 0x4, offset = 0x4, fixed_abs, tag = 'smem constant byte address 0x4 - core index']
  #allocation1 [shape = 'u32[144,128]{1,0:T(1,128)}', space=vmem, size = 0x12000, scoped, tag = 'internal scratch']
  %s0 = inlined_call_operand.vmem [shape: f32[8,64], index: 0, kind: input, shape index: {}]
  %s1 = inlined_call_operand.vmem [shape: bf16[64,128], index: 1, kind: input, shape index: {}]
  %s2 = inlined_call_operand.vmem [shape: f32[1,128], index: 2, kind: input, shape index: {}]
  %s3 = inlined_call_operand.vmem [shape: bf16[128,64], index: 3, kind: input, shape index: {}]
  %s4 = inlined_call_operand.vmem [shape: f32[1,64], index: 4, kind: input, shape index: {}]
  %s5 = inlined_call_operand.hbm [shape: f32[8,64], index: 5, kind: output, shape index: {}]
  %s6 = sld [smem:[#allocation0]]
  $region30: #{predictor_forward.1} parent=0
    _
  %s8 = ssub.s32 1, %s6
  %s9 = scalar_select 0, %s8, %s6
  $region1: #{predictor_forward.1} parent=0
    #allocation2 [shape = 'u8[4096]{0}', space=vmem, size = 0x1000, scoped, tag = 'output window, operand 0, single buffered']
    #allocation3 [shape = 's32[1]{0}', space=sflag, size = 0x4, scoped, tag = 'scoped memory for predictor_forward.1']
    %10 = vsyncpa [#allocation3], 0
    // Predicated region
    $region2: #{predictor_forward.1} parent=1 // pred_check
      _
    $region3: #{predictor_forward.1} parent=1 // pred_check_branch
      %12 = sbr.rel (0) target = $region5
    $region4: #{predictor_forward.1} parent=1 // pred_region
      _
    $region5: #{predictor_forward.1} parent=1 // pred_fallthru
      _
    // Predicated region
    $region6: #{predictor_forward.1} parent=1 // pred_check
      _
    $region7: #{predictor_forward.1} parent=1 // pred_check_branch
      %14 = sbr.rel (0) target = $region9
    $region8: #{predictor_forward.1} parent=1 // pred_region
      _
    $region9: #{predictor_forward.1} parent=1 // pred_fallthru
      _
    // Predicated region
    $region10: #{predictor_forward.1} parent=1 // pred_check
      _
    $region11: #{predictor_forward.1} parent=1 // pred_check_branch
      %16 = sbr.rel (0) target = $region13
    $region12: #{predictor_forward.1} parent=1 // pred_region
      _
    $region13: #{predictor_forward.1} parent=1 // pred_fallthru
      _
    // Predicated region
    $region14: #{predictor_forward.1} parent=1 // pred_check
      _
    $region15: #{predictor_forward.1} parent=1 // pred_check_branch
      %18 = sbr.rel (0) target = $region17
    $region16: #{predictor_forward.1} parent=1 // pred_region
      _
    $region17: #{predictor_forward.1} parent=1 // pred_fallthru
      _
    // Predicated region
    $region18: #{predictor_forward.1} parent=1 // pred_check
      _
    $region19: #{predictor_forward.1} parent=1 // pred_check_branch
      %20 = sbr.rel (0) target = $region21
    $region20: #{predictor_forward.1} parent=1 // pred_region
      _
    $region21: #{predictor_forward.1} parent=1 // pred_fallthru
      _
    %v22 = vld [vmem:[%s0] sm:$0xff]
    %v23 = vpack.c.bf16 %v22, %v22
    %v24 = vld [vmem:[%s1] sm:$0xf]
    %v25 = vld [vmem:[%s1 + $0x4] sm:$0xf]
    %v26 = vld [vmem:[%s1 + $0x8] sm:$0xf]
    %v27 = vld [vmem:[%s1 + $0xc] sm:$0xf]
    %v28 = vld [vmem:[%s1 + $0x10] sm:$0xf]
    %v29 = vld [vmem:[%s1 + $0x14] sm:$0xf]
    %v30 = vld [vmem:[%s1 + $0x18] sm:$0xf]
    %v31 = vld [vmem:[%s1 + $0x1c] sm:$0xf]
    %v32 = vld [vmem:[%s2] sm:$0x1]
    %v34 = vlaneseq
    %v35 = vshrl.u32 %v34, 7
    %v36 = vsub.s32 0, %v35
    %v37 = vrot.slane %v32, %v36
    %v47 = vunpack.c.l.b16 %v24
    %v48 = vunpack.c.l.b16 %v25
    %v49 = vunpack.c.l.b16 %v26
    %v50 = vunpack.c.l.b16 %v27
    %v51 = vunpack.c.l.b16 %v28
    %v52 = vunpack.c.l.b16 %v29
    %v53 = vunpack.c.l.b16 %v30
    %v54 = vunpack.c.l.b16 %v31
    %v55 = vpack.c.b16 %v48, %v47
    %v56 = vpack.c.b16 %v50, %v49
    %v57 = vpack.c.b16 %v52, %v51
    %v58 = vpack.c.b16 %v54, %v53
    %vm63 = vcmask 523264
    %v65 = vsel %vm63, %v23, 0
    %67 = vmatprep.subr.bf16.mxu0 0
    %68 = vmatpush1.bf16.msra.mxu0 %v55
    %69 = vmatprep.subr.bf16.mxu0 0
    %70 = vmatpush1.bf16.msra.mxu0 %v56
    %71 = vmatprep.subr.bf16.mxu0 0
    %72 = vmatpush1.bf16.msra.mxu0 %v57
    %73 = vmatprep.subr.bf16.mxu0 0
    %74 = vmatpush1.bf16.msra.mxu0 %v58
    %75 = vmatprep.subr.bf16.mxu0 0
    %76 = vmatpush1.bf16.msra.mxu0 0
    %77 = vmatprep.subr.bf16.mxu0 0
    %78 = vmatpush1.bf16.msra.mxu0 0
    %79 = vmatprep.subr.bf16.mxu0 0
    %80 = vmatpush1.bf16.msra.mxu0 0
    %81 = vmatprep.subr.bf16.mxu0 0
    %82 = vmatpush1.bf16.msra.mxu0 0
    %83 = vmatprep.subr.bf16.mxu0 0
    %84 = vmatpush1.bf16.msra.mxu0 0
    %85 = vmatprep.subr.bf16.mxu0 0
    %86 = vmatpush1.bf16.msra.mxu0 0
    %87 = vmatprep.subr.bf16.mxu0 0
    %88 = vmatpush1.bf16.msra.mxu0 0
    %89 = vmatprep.subr.bf16.mxu0 0
    %90 = vmatpush1.bf16.msra.mxu0 0
    %91 = vmatprep.subr.bf16.mxu0 0
    %92 = vmatpush1.bf16.msra.mxu0 0
    %93 = vmatprep.subr.bf16.mxu0 0
    %94 = vmatpush1.bf16.msra.mxu0 0
    %95 = vmatprep.subr.bf16.mxu0 0
    %96 = vmatpush1.bf16.msra.mxu0 0
    %97 = vmatprep.subr.bf16.mxu0 0
    %98 = vmatpush1.bf16.msra.mxu0 0
    %99 = vmatprep.mubr.bf16.mxu0 0
    %100 = vmatmul.mubr.bf16.gmra.mrb[0].mxu0 %v65
    %v101 = vpop.f32.mrb[0].mxu0
    %v102 = vadd.f32 %v37, %v101
    %v103 = vpop.f32.mrb[0].mxu0
    %v104 = vpop.f32.mrb[0].mxu0
    %v105 = vpop.f32.mrb[0].mxu0
    %106 = vdwg.mxu0
    %v107 = vmax.f32 %v102, 0.0
    %v108 = vpack.c.bf16 %v107, %v107
    %v109 = vld [vmem:[%s3] sm:$0xf]
    %v110 = vld [vmem:[%s3 + $0x4] sm:$0xf]
    %v111 = vld [vmem:[%s3 + $0x8] sm:$0xf]
    %v112 = vld [vmem:[%s3 + $0xc] sm:$0xf]
    %v113 = vld [vmem:[%s3 + $0x10] sm:$0xf]
    %v114 = vld [vmem:[%s3 + $0x14] sm:$0xf]
    %v115 = vld [vmem:[%s3 + $0x18] sm:$0xf]
    %v116 = vld [vmem:[%s3 + $0x1c] sm:$0xf]
    %v117 = vld [vmem:[%s3 + $0x20] sm:$0xf]
    %v118 = vld [vmem:[%s3 + $0x24] sm:$0xf]
    %v119 = vld [vmem:[%s3 + $0x28] sm:$0xf]
    %v120 = vld [vmem:[%s3 + $0x2c] sm:$0xf]
    %v121 = vld [vmem:[%s3 + $0x30] sm:$0xf]
    %v122 = vld [vmem:[%s3 + $0x34] sm:$0xf]
    %v123 = vld [vmem:[%s3 + $0x38] sm:$0xf]
    %v124 = vld [vmem:[%s3 + $0x3c] sm:$0xf]
    %v125 = vld [vmem:[%s4] sm:$0x1]
    %v127 = vlaneseq
    %v128 = vshrl.u32 %v127, 7
    %v129 = vsub.s32 0, %v128
    %v130 = vrot.slane %v125, %v129
    %v148 = vunpack.c.l.b16 %v109
    %v149 = vunpack.c.l.b16 %v110
    %v150 = vunpack.c.l.b16 %v111
    %v151 = vunpack.c.l.b16 %v112
    %v152 = vunpack.c.l.b16 %v113
    %v153 = vunpack.c.l.b16 %v114
    %v154 = vunpack.c.l.b16 %v115
    %v155 = vunpack.c.l.b16 %v116
    %v156 = vunpack.c.l.b16 %v117
    %v157 = vunpack.c.l.b16 %v118
    %v158 = vunpack.c.l.b16 %v119
    %v159 = vunpack.c.l.b16 %v120
    %v160 = vunpack.c.l.b16 %v121
    %v161 = vunpack.c.l.b16 %v122
    %v162 = vunpack.c.l.b16 %v123
    %v163 = vunpack.c.l.b16 %v124
    %v164 = vpack.c.b16 %v149, %v148
    %v165 = vpack.c.b16 %v151, %v150
    %v166 = vpack.c.b16 %v153, %v152
    %v167 = vpack.c.b16 %v155, %v154
    %v168 = vpack.c.b16 %v157, %v156
    %v169 = vpack.c.b16 %v159, %v158
    %v170 = vpack.c.b16 %v161, %v160
    %v171 = vpack.c.b16 %v163, %v162
    %180 = vmatprep.subr.bf16.mxu0 0
    %181 = vmatpush1.bf16.msra.mxu0 %v164
    %182 = vmatprep.subr.bf16.mxu0 0
    %183 = vmatpush1.bf16.msra.mxu0 %v165
    %184 = vmatprep.subr.bf16.mxu0 0
    %185 = vmatpush1.bf16.msra.mxu0 %v166
    %186 = vmatprep.subr.bf16.mxu0 0
    %187 = vmatpush1.bf16.msra.mxu0 %v167
    %188 = vmatprep.subr.bf16.mxu0 0
    %189 = vmatpush1.bf16.msra.mxu0 %v168
    %190 = vmatprep.subr.bf16.mxu0 0
    %191 = vmatpush1.bf16.msra.mxu0 %v169
    %192 = vmatprep.subr.bf16.mxu0 0
    %193 = vmatpush1.bf16.msra.mxu0 %v170
    %194 = vmatprep.subr.bf16.mxu0 0
    %195 = vmatpush1.bf16.msra.mxu0 %v171
    %196 = vmatprep.subr.bf16.mxu0 0
    %197 = vmatpush1.bf16.msra.mxu0 0
    %198 = vmatprep.subr.bf16.mxu0 0
    %199 = vmatpush1.bf16.msra.mxu0 0
    %200 = vmatprep.subr.bf16.mxu0 0
    %201 = vmatpush1.bf16.msra.mxu0 0
    %202 = vmatprep.subr.bf16.mxu0 0
    %203 = vmatpush1.bf16.msra.mxu0 0
    %204 = vmatprep.subr.bf16.mxu0 0
    %205 = vmatpush1.bf16.msra.mxu0 0
    %206 = vmatprep.subr.bf16.mxu0 0
    %207 = vmatpush1.bf16.msra.mxu0 0
    %208 = vmatprep.subr.bf16.mxu0 0
    %209 = vmatpush1.bf16.msra.mxu0 0
    %210 = vmatprep.subr.bf16.mxu0 0
    %211 = vmatpush1.bf16.msra.mxu0 0
    %212 = vmatprep.mubr.bf16.mxu0 0
    %213 = vmatmul.mubr.bf16.gmra.mrb[0].mxu0 %v108
    %v214 = vpop.f32.mrb[0].mxu0
    %v215 = vadd.f32 %v130, %v214
    %v216 = vpop.f32.mrb[0].mxu0
    %v217 = vpop.f32.mrb[0].mxu0
    %v218 = vpop.f32.mrb[0].mxu0
    %219 = vdwg.mxu0
    %220 = vst.msk [vmem:[#allocation2] sm:$0xff] %vm63, %v215
    // Predicated region
    $region22: #{predictor_forward.1} parent=1 // pred_check
      _
    $region23: #{predictor_forward.1} parent=1 // pred_check_branch
      %222 = sbr.rel (0) target = $region25
    $region24: #{predictor_forward.1} parent=1 // pred_region
      %s224 = ssub.s32 128, 128
      %225 = vsyncadd [#allocation3], %s224
      %s227 = sshll.u32 [#allocation2], 4
      %s228 = int_to_ptr.vmem [resolvable:$true] %s227
      %230 = dma.vmem_to_hbm [thread:$0]  %s228, 128, %s5, [#allocation3]
    $region25: #{predictor_forward.1} parent=1 // pred_fallthru
      _
    // Predicated region
    $region26: #{predictor_forward.1} parent=1 // pred_check
      _
    $region27: #{predictor_forward.1} parent=1 // pred_check_branch
      %232 = sbr.rel (0) target = $region29
    $region28: #{predictor_forward.1} parent=1 // pred_region
      %233 = dma.done [#allocation3], 128
    $region29: #{predictor_forward.1} parent=1 // pred_fallthru
      _
    %234 = vsyncpa [#allocation3], 1

</llo_original>
